<compile_context>
chip_gen: v5e
topology: v5e:2x2
jax: 0.10.0
libtpu: 0.0.40
codegen_flags: <defaults>
</compile_context>

<pallas_src>
import functools

import jax
import jax.numpy as jnp
from jax import lax
from jax.experimental import pallas as pl
from jax.experimental.pallas import tpu as pltpu

_LANE = 128


def _round_up(v, m):
    return ((v + m - 1) // m) * m


def _cdiv(a, b):
    return -(-a // b)


def _cartnn_kernel(x_ref, w1_ref, b1_ref, w2_ref, b2_ref, out_ref, *, chunk):
    """Fused Linear(4,H) -> ReLU -> Linear(H,1) on one batch tile.

    x_ref  : (4, TB)   batch on the 128-lane axis
    w1_ref : (H, 4)    resident across the whole grid
    b1_ref : (H, 1)
    w2_ref : (H, 1)
    b2_ref : (1, 1)    SMEM scalar
    out_ref: (1, TB)   lane-dense output slab
    """
    w1 = w1_ref[...]
    b1 = b1_ref[...]
    w2 = w2_ref[...]
    b2 = b2_ref[0, 0]

    tb = x_ref.shape[1]
    n_chunks = tb // chunk  # wrapper guarantees chunk | tb

    def body(c, carry):
        start = pl.multiple_of(c * chunk, chunk)
        x_c = x_ref[:, pl.ds(start, chunk)]                        # (4, C)
        # Hidden layer on the MXU: (H, 4) @ (4, C) -> (H, C); keep it on the
        # MXU (vextended slot has slack) rather than VPU broadcast-FMAs.
        h = jnp.dot(w1, x_c, preferred_element_type=jnp.float32) + b1
        h = jnp.maximum(h, 0.0)                                    # ReLU (VPU)
        # Output layer with N=1: broadcast multiply + sublane (XLU) reduce.
        # TODO(synk): on v7x, fold |w2| into w1/b1 and split hidden units by
        # sign (and fold b1 into the matmul via a ones row) to shave VALU ops;
        # skipped here because it needs concrete weights at wrapper time.
        y = jnp.sum(h * w2, axis=0, keepdims=True) + b2            # (1, C)
        out_ref[:, pl.ds(start, chunk)] = y.astype(out_ref.dtype)
        return carry

    lax.fori_loop(0, n_chunks, body, 0, unroll=(n_chunks <= 4))


def cartnn_forward(x, w1, b1, w2, b2, *, tb_cap=256 * 1024, chunk=8 * 1024):
    """x: (B, 4); w1: (4, H); b1: (1, H); w2: (H, 1); b2: (1, 1) -> (B, 1)."""
    B = x.shape[0]
    H = w1.shape[1]

    # Lane-chunk size (multiple of the 128-lane vreg width).
    chunk = max(_LANE, (chunk // _LANE) * _LANE)
    # Tile cap: multiple of chunk so the inner loop divides evenly.
    tb_cap = max(chunk, (tb_cap // chunk) * chunk)

    b128 = _round_up(B, _LANE)
    if b128 <= chunk:
        # Tiny batch: single tile, single chunk.
        chunk_eff = b128
        n_tiles = 1
        tb = b128
    else:
        chunk_eff = chunk
        b_pad0 = _round_up(b128, chunk)
        n_tiles = _cdiv(b_pad0, tb_cap)
        if n_tiles == 1 and b_pad0 >= 2 * chunk:
            n_tiles = 2            # >=2 grid steps so megacore (v7x) can split
        # Size tiles to the work, not to tb_cap -> minimal last-tile padding.
        tb = _round_up(_cdiv(b_pad0, n_tiles), chunk)
    b_pad = n_tiles * tb

    # Single transpose+pad pass (no zeros().at[].set() round trip). Ideally x
    # would already be feature-major (4, B) upstream and this would vanish.
    x_t = jnp.pad(x.astype(jnp.float32).T, ((0, 0), (0, b_pad - B)))  # (4, B_pad)
    w1_t = jnp.asarray(w1, jnp.float32).T              # (H, 4)
    b1_c = jnp.asarray(b1, jnp.float32).reshape(H, 1)  # (H, 1)
    w2_c = jnp.asarray(w2, jnp.float32).reshape(H, 1)  # (H, 1)
    b2_s = jnp.asarray(b2, jnp.float32).reshape(1, 1)  # (1, 1) -> SMEM scalar

    kernel = functools.partial(_cartnn_kernel, chunk=chunk_eff)

    y_t = pl.pallas_call(
        kernel,
        out_shape=jax.ShapeDtypeStruct((1, b_pad), jnp.float32),
        grid=(n_tiles,),
        in_specs=[
            pl.BlockSpec((4, tb), lambda i: (0, i)),            # x tile (pipelined)
            pl.BlockSpec((H, 4), lambda i: (0, 0)),             # w1 resident
            pl.BlockSpec((H, 1), lambda i: (0, 0)),             # b1 resident
            pl.BlockSpec((H, 1), lambda i: (0, 0)),             # w2 resident
            pl.BlockSpec(memory_space=pltpu.MemorySpace.SMEM),  # b2 scalar
        ],
        out_specs=pl.BlockSpec((1, tb), lambda i: (0, i)),      # lane-dense output
        compiler_params=pltpu.CompilerParams(
            dimension_semantics=("parallel",)),                 # megacore on v7x
    )(x_t, w1_t, b1_c, w2_c, b2_s)

    return y_t[:, :B].T                                          # (B, 1)


def init_params(key, hidden_size):
    # Deterministic init mimicking torch.nn.Linear default:
    # U(-1/sqrt(fan_in), 1/sqrt(fan_in)) for both weight and bias.
    k1, k2, k3, k4 = jax.random.split(key, 4)
    bound1 = 1.0 / jnp.sqrt(4.0)
    bound2 = 1.0 / jnp.sqrt(float(hidden_size))
    w1 = jax.random.uniform(k1, (4, hidden_size), jnp.float32, -bound1, bound1)
    b1 = jax.random.uniform(k2, (1, hidden_size), jnp.float32, -bound1, bound1)
    w2 = jax.random.uniform(k3, (hidden_size, 1), jnp.float32, -bound2, bound2)
    b2 = jax.random.uniform(k4, (1, 1), jnp.float32, -bound2, bound2)
    return w1, b1, w2, b2


if __name__ == "__main__":
    key = jax.random.PRNGKey(0)
    hidden_size = 32
    batch = 8   # cartpole-style 4-dim state; small demo batch (padded to 128 lanes)

    kx, kp = jax.random.split(key)
    x = jax.random.normal(kx, (batch, 4), jnp.float32)
    w1, b1, w2, b2 = init_params(kp, hidden_size)

    y = cartnn_forward(x, w1, b1, w2, b2)
    jax.block_until_ready(y)

    # Reference check in plain JAX (same semantics as the PyTorch forward).
    ref = jnp.maximum(x @ w1 + b1, 0.0) @ w2 + b2
    assert y.shape == (batch, 1)
    assert jnp.allclose(y, ref, atol=1e-5, rtol=1e-5)

    # Ragged larger batch with small caps to exercise the multi-tile grid AND
    # the in-kernel multi-chunk loop (3 tiles x 3 chunks here).
    big_b = 2 * 4096 + 77
    xb = jax.random.normal(jax.random.PRNGKey(1), (big_b, 4), jnp.float32)
    yb = cartnn_forward(xb, w1, b1, w2, b2, tb_cap=4096, chunk=1024)
    jax.block_until_ready(yb)
    refb = jnp.maximum(xb @ w1 + b1, 0.0) @ w2 + b2
    assert yb.shape == (big_b, 1)
    assert jnp.allclose(yb, refb, atol=1e-4, rtol=1e-4)

    print("KERNEL_OK")
</pallas_src>

<mosaic_0001>
module attributes {stable_mosaic.version = 11 : i64} {
  func.func @_cartnn_kernel(%arg0: i32, %arg1: memref<4x128xf32, #tpu.memory_space<vmem>>, %arg2: memref<32x4xf32, #tpu.memory_space<vmem>>, %arg3: memref<32x1xf32, #tpu.memory_space<vmem>>, %arg4: memref<32x1xf32, #tpu.memory_space<vmem>>, %arg5: memref<1x1xf32, #tpu.memory_space<smem>>, %arg6: memref<1x128xf32, #tpu.memory_space<vmem>>) attributes {dimension_semantics = [#tpu.dimension_semantics<parallel>], iteration_bounds = array<i64: 1>, scalar_prefetch = 0 : i64, scratch_operands = 0 : i64, tpu.core_type = #tpu.core_type<tc>, window_params = [{transform_indices = @transform_0, window_bounds = array<i64: 4, 128>}, {pipeline_mode = #tpu.pipeline_mode<synchronous>, transform_indices = @transform_1, window_bounds = array<i64: 32, 4>}, {pipeline_mode = #tpu.pipeline_mode<synchronous>, transform_indices = @transform_2, window_bounds = array<i64: 32, 1>}, {pipeline_mode = #tpu.pipeline_mode<synchronous>, transform_indices = @transform_3, window_bounds = array<i64: 32, 1>}, {transform_indices = @transform_4, window_bounds = array<i64: 1, 1>}, {transform_indices = @transform_5, window_bounds = array<i64: 1, 128>}]} {
    %c0 = arith.constant 0 : index
    %c0_0 = arith.constant 0 : index
    %0 = vector.load %arg2[%c0, %c0_0] : memref<32x4xf32, #tpu.memory_space<vmem>>, vector<32x4xf32>
    %c0_1 = arith.constant 0 : index
    %c0_2 = arith.constant 0 : index
    %1 = vector.load %arg3[%c0_1, %c0_2] : memref<32x1xf32, #tpu.memory_space<vmem>>, vector<32x1xf32>
    %c0_3 = arith.constant 0 : index
    %c0_4 = arith.constant 0 : index
    %2 = vector.load %arg4[%c0_3, %c0_4] : memref<32x1xf32, #tpu.memory_space<vmem>>, vector<32x1xf32>
    %c0_5 = arith.constant 0 : index
    %c0_6 = arith.constant 0 : index
    %3 = memref.load %arg5[%c0_5, %c0_6] : memref<1x1xf32, #tpu.memory_space<smem>>
    %c0_i32 = arith.constant 0 : i32
    %c128_i32 = arith.constant 128 : i32
    %4 = arith.muli %c0_i32, %c128_i32 : i32
    %5 = tpu.assume_multiple %4, 128 : i32
    %c0_7 = arith.constant 0 : index
    %6 = arith.index_cast %5 : i32 to index
    %7 = vector.load %arg1[%c0_7, %6] : memref<4x128xf32, #tpu.memory_space<vmem>>, vector<4x128xf32>
    %cst = arith.constant dense<0.000000e+00> : vector<32x128xf32>
    %8 = tpu.matmul %0, %7, %cst {dimension_numbers = #tpu.dot_dimension_numbers<[1], [0], [0], [1], [0, 0, 1, 1], [], []>} : vector<32x4xf32>, vector<4x128xf32>, vector<32x128xf32> -> vector<32x128xf32>
    %9 = vector.broadcast %1 : vector<32x1xf32> to vector<32x128xf32>
    %10 = arith.addf %8, %9 : vector<32x128xf32>
    %cst_8 = arith.constant 0.000000e+00 : f32
    %11 = vector.broadcast %cst_8 : f32 to vector<32x128xf32>
    %12 = arith.maximumf %10, %11 : vector<32x128xf32>
    %13 = vector.broadcast %2 : vector<32x1xf32> to vector<32x128xf32>
    %14 = arith.mulf %12, %13 : vector<32x128xf32>
    %cst_9 = arith.constant dense<0.000000e+00> : vector<128xf32>
    %15 = vector.multi_reduction <add>, %14, %cst_9 [0] : vector<32x128xf32> to vector<128xf32>
    %16 = vector.shape_cast %15 : vector<128xf32> to vector<1x128xf32>
    %17 = vector.broadcast %3 : f32 to vector<1x128xf32>
    %18 = arith.addf %16, %17 : vector<1x128xf32>
    %c0_10 = arith.constant 0 : index
    %19 = arith.index_cast %5 : i32 to index
    %20 = vector.load %arg6[%c0_10, %19] : memref<1x128xf32, #tpu.memory_space<vmem>>, vector<1x128xf32>
    tpu.vector_store %arg6[%c0_10, %19], %18 {strides = array<i32>} : memref<1x128xf32, #tpu.memory_space<vmem>>, vector<1x128xf32>,
    %c1_i32 = arith.constant 1 : i32
    return
  }
  func.func @transform_0(%arg0: i32) -> (i32, i32) {
    %c0_i32 = arith.constant 0 : i32
    %c0_i32_0 = arith.constant 0 : i32
    return %c0_i32, %arg0 : i32, i32
  }
  func.func @transform_1(%arg0: i32) -> (i32, i32) {
    %c0_i32 = arith.constant 0 : i32
    %c0_i32_0 = arith.constant 0 : i32
    %c0_i32_1 = arith.constant 0 : i32
    return %c0_i32, %c0_i32_0 : i32, i32
  }
  func.func @transform_2(%arg0: i32) -> (i32, i32) {
    %c0_i32 = arith.constant 0 : i32
    %c0_i32_0 = arith.constant 0 : i32
    %c0_i32_1 = arith.constant 0 : i32
    return %c0_i32, %c0_i32_0 : i32, i32
  }
  func.func @transform_3(%arg0: i32) -> (i32, i32) {
    %c0_i32 = arith.constant 0 : i32
    %c0_i32_0 = arith.constant 0 : i32
    %c0_i32_1 = arith.constant 0 : i32
    return %c0_i32, %c0_i32_0 : i32, i32
  }
  func.func @transform_4(%arg0: i32) -> (i32, i32) {
    %c0_i32 = arith.constant 0 : i32
    %c0_i32_0 = arith.constant 0 : i32
    %c0_i32_1 = arith.constant 0 : i32
    return %c0_i32, %c0_i32_0 : i32, i32
  }
  func.func @transform_5(%arg0: i32) -> (i32, i32) {
    %c0_i32 = arith.constant 0 : i32
    %c0_i32_0 = arith.constant 0 : i32
    return %c0_i32, %arg0 : i32, i32
  }
}

</mosaic_0001>

<llo_original>
// kernel: tpu_custom_call.1
$region0: #{tpu_custom_call.1}
  #allocation0 [shape = 'u32[]', space=smem, size = 0x4, offset = 0x4, fixed_abs, tag = 'smem constant byte address 0x4 - core index']
  #allocation1 [shape = 'u32[72,128]{1,0:T(1,128)}', space=vmem, size = 0x9000, scoped, tag = 'internal scratch']
  #allocation2 [shape = 'f32[1,1]{1,0:T(1,128)S(6)}', space=smem, size = 0x200, scoped, tag = 'scoped memory for tpu_custom_call.1']
  %s0 = inlined_call_operand.vmem [shape: f32[4,128], index: 0, kind: input, shape index: {}]
  %s1 = inlined_call_operand.vmem [shape: f32[32,4], index: 1, kind: input, shape index: {}]
  %s2 = inlined_call_operand.vmem [shape: f32[32,1], index: 2, kind: input, shape index: {}]
  %s3 = inlined_call_operand.vmem [shape: f32[32,1], index: 3, kind: input, shape index: {}]
  %s4 = inlined_call_operand.<no memory space> [shape: f32[1,1], index: 4, kind: input, shape index: {}]
  %s5 = inlined_call_operand.hbm [shape: f32[1,128], index: 5, kind: output, shape index: {}]
  %s6 = sld [smem:[#allocation0]]
  $region30: #{tpu_custom_call.1} parent=0
    _
  %s8 = ssub.s32 1, %s6
  %s9 = scalar_select 0, %s8, %s6
  %10 = sst [smem:[#allocation2]] %s4
  $region1: #{tpu_custom_call.1} parent=0
    #allocation3 [shape = 'u8[512]{0}', space=vmem, size = 0x400, scoped, tag = 'output window, operand 0, single buffered']
    #allocation4 [shape = 's32[1]{0}', space=sflag, size = 0x4, scoped, tag = 'scoped memory for tpu_custom_call.1']
    %11 = vsyncpa [#allocation4], 0
    // Predicated region
    $region2: #{tpu_custom_call.1} parent=1 // pred_check
      _
    $region3: #{tpu_custom_call.1} parent=1 // pred_check_branch
      %13 = sbr.rel (0) target = $region5
    $region4: #{tpu_custom_call.1} parent=1 // pred_region
      _
    $region5: #{tpu_custom_call.1} parent=1 // pred_fallthru
      _
    // Predicated region
    $region6: #{tpu_custom_call.1} parent=1 // pred_check
      _
    $region7: #{tpu_custom_call.1} parent=1 // pred_check_branch
      %15 = sbr.rel (0) target = $region9
    $region8: #{tpu_custom_call.1} parent=1 // pred_region
      _
    $region9: #{tpu_custom_call.1} parent=1 // pred_fallthru
      _
    // Predicated region
    $region10: #{tpu_custom_call.1} parent=1 // pred_check
      _
    $region11: #{tpu_custom_call.1} parent=1 // pred_check_branch
      %17 = sbr.rel (0) target = $region13
    $region12: #{tpu_custom_call.1} parent=1 // pred_region
      _
    $region13: #{tpu_custom_call.1} parent=1 // pred_fallthru
      _
    // Predicated region
    $region14: #{tpu_custom_call.1} parent=1 // pred_check
      _
    $region15: #{tpu_custom_call.1} parent=1 // pred_check_branch
      %19 = sbr.rel (0) target = $region17
    $region16: #{tpu_custom_call.1} parent=1 // pred_region
      _
    $region17: #{tpu_custom_call.1} parent=1 // pred_fallthru
      _
    // Predicated region
    $region18: #{tpu_custom_call.1} parent=1 // pred_check
      _
    $region19: #{tpu_custom_call.1} parent=1 // pred_check_branch
      %21 = sbr.rel (0) target = $region21
    $region20: #{tpu_custom_call.1} parent=1 // pred_region
      _
    $region21: #{tpu_custom_call.1} parent=1 // pred_fallthru
      _
    %v22 = vld [vmem:[%s1] sm:$0xff]
    %v23 = vld [vmem:[%s1 + $0x8] sm:$0xff]
    %v24 = vld [vmem:[%s1 + $0x10] sm:$0xff]
    %v25 = vld [vmem:[%s1 + $0x18] sm:$0xff]
    %v26 = vld [vmem:[%s2] sm:$0xff]
    %v27 = vld [vmem:[%s2 + $0x8] sm:$0xff]
    %v28 = vld [vmem:[%s2 + $0x10] sm:$0xff]
    %v29 = vld [vmem:[%s2 + $0x18] sm:$0xff]
    %v30 = vld [vmem:[%s3] sm:$0xff]
    %v31 = vld [vmem:[%s3 + $0x8] sm:$0xff]
    %v32 = vld [vmem:[%s3 + $0x10] sm:$0xff]
    %v33 = vld [vmem:[%s3 + $0x18] sm:$0xff]
    %s34 = sld [smem:[#allocation2]]
    %v35 = vld [vmem:[%s0] sm:$0xf]
    %37 = vset.pattern.permute.xlu0 0
    %38 = vperm.xlu0 %37, %v26
    %v39 = vpop.permute.xlu0 %38
    %42 = vset.pattern.permute.xlu0 0
    %43 = vperm.xlu0 %42, %v27
    %v44 = vpop.permute.xlu0 %43
    %47 = vset.pattern.permute.xlu0 0
    %48 = vperm.xlu0 %47, %v28
    %v49 = vpop.permute.xlu0 %48
    %52 = vset.pattern.permute.xlu0 0
    %53 = vperm.xlu0 %52, %v29
    %v54 = vpop.permute.xlu0 %53
    %vm56 = vcmask 31744
    %v58 = vsel %vm56, %v22, 0
    %v61 = vsel %vm56, %v23, 0
    %v64 = vsel %vm56, %v24, 0
    %v67 = vsel %vm56, %v25, 0
    %vm69 = vcmask 1043456
    %v71 = vsel %vm69, %v35, 0
    %73 = vmatpush.msra.mxu0 0.0
    %74 = vmatpush.msra.mxu0 0.0
    %75 = vmatpush.msra.mxu0 0.0
    %76 = vmatpush.msra.mxu0 0.0
    %77 = vmatpush.msra.mxu0 0.0
    %78 = vmatpush.msra.mxu0 0.0
    %79 = vmatpush.msra.mxu0 0.0
    %80 = vmatpush.msra.mxu0 0.0
    %81 = vmatpush.msra.mxu0 0.0
    %82 = vmatpush.msra.mxu0 0.0
    %83 = vmatpush.msra.mxu0 0.0
    %84 = vmatpush.msra.mxu0 0.0
    %85 = vmatpush.msra.mxu0 0.0
    %86 = vmatpush.msra.mxu0 0.0
    %87 = vmatpush.msra.mxu0 0.0
    %88 = vmatpush.msra.mxu0 %v71
    %89 = vmatmul.f32.gmra.mxu0 %v58
    %v90 = vpop.f32.mrf.mxu0
    %v91 = vadd.f32 %v39, %v90
    %92 = vmatmul.f32.gmra.mxu0 %v61
    %v93 = vpop.f32.mrf.mxu0
    %v94 = vadd.f32 %v44, %v93
    %95 = vmatmul.f32.gmra.mxu0 %v64
    %v96 = vpop.f32.mrf.mxu0
    %v97 = vadd.f32 %v49, %v96
    %98 = vmatmul.f32.gmra.mxu0 %v67
    %v99 = vpop.f32.mrf.mxu0
    %v100 = vadd.f32 %v54, %v99
    %101 = vdwg.mxu0
    %v102 = vmax.f32 %v91, 0.0
    %v103 = vmax.f32 %v94, 0.0
    %v104 = vmax.f32 %v97, 0.0
    %v105 = vmax.f32 %v100, 0.0
    %107 = vset.pattern.permute.xlu0 0
    %108 = vperm.xlu0 %107, %v30
    %v109 = vpop.permute.xlu0 %108
    %112 = vset.pattern.permute.xlu0 0
    %113 = vperm.xlu0 %112, %v31
    %v114 = vpop.permute.xlu0 %113
    %117 = vset.pattern.permute.xlu0 0
    %118 = vperm.xlu0 %117, %v32
    %v119 = vpop.permute.xlu0 %118
    %122 = vset.pattern.permute.xlu0 0
    %123 = vperm.xlu0 %122, %v33
    %v124 = vpop.permute.xlu0 %123
    %v126 = vmul.f32 %v102, %v109
    %v127 = vmul.f32 %v103, %v114
    %v128 = vmul.f32 %v104, %v119
    %v129 = vmul.f32 %v105, %v124
    %v130 = vadd.f32 %v126, %v127
    %v131 = vadd.f32 %v130, %v128
    %v132 = vadd.f32 %v131, %v129
    %v133 = vrot.slane %v132, 4
    %v134 = vadd.f32 %v132, %v133
    %v135 = vrot.slane %v134, 2
    %v136 = vadd.f32 %v134, %v135
    %v137 = vrot.slane %v136, 1
    %v138 = vadd.f32 %v136, %v137
    %v139 = vstv %s34
    %v140 = vadd.f32 %v138, %v139
    %141 = vst [vmem:[#allocation3] sm:$0x1] %v140
    // Predicated region
    $region22: #{tpu_custom_call.1} parent=1 // pred_check
      _
    $region23: #{tpu_custom_call.1} parent=1 // pred_check_branch
      %143 = sbr.rel (0) target = $region25
    $region24: #{tpu_custom_call.1} parent=1 // pred_region
      %145 = vsyncadd [#allocation4], 0
      %s147 = sshll.u32 [#allocation3], 4
      %s148 = int_to_ptr.vmem [resolvable:$true] %s147
      %s149 = sshll.u32 %s5, 4
      %s150 = int_to_ptr.hbm [resolvable:$true] %s149
      %152 = dma.vmem_to_hbm [thread:$0]  %s148, 16, %s150, [#allocation4]
    $region25: #{tpu_custom_call.1} parent=1 // pred_fallthru
      _
    // Predicated region
    $region26: #{tpu_custom_call.1} parent=1 // pred_check
      _
    $region27: #{tpu_custom_call.1} parent=1 // pred_check_branch
      %154 = sbr.rel (0) target = $region29
    $region28: #{tpu_custom_call.1} parent=1 // pred_region
      %156 = dma.done [#allocation4], 16
    $region29: #{tpu_custom_call.1} parent=1 // pred_fallthru
      _
    %157 = vsyncpa [#allocation4], 1

</llo_original>
